<compile_context>
chip_gen: v5e
topology: v5e:2x2
jax: 0.10.0
libtpu: 0.0.40
codegen_flags: <defaults>
</compile_context>

<pallas_src>
import math

import jax
import jax.numpy as jnp
from jax.experimental import pallas as pl
from jax.experimental.pallas import tpu as pltpu

# ----------------------------- config ---------------------------------------
B = 2           # batch
S = 8           # sequence length (power of two, see mask construction)
D = 32          # d_embedding
H = 4           # num_heads
DH = D // H     # head dim
EPS = 1e-5      # nn.LayerNorm default eps
GELU_ALPHA = 1.782

LOG2_S = S.bit_length() - 1
assert (1 << LOG2_S) == S, "S must be a power of two for the shift-based mask"


# ----------------------------- kernel ---------------------------------------
def _layernorm(v, gamma, beta):
    mu = jnp.mean(v, axis=-1, keepdims=True)
    var = jnp.mean(jnp.square(v - mu), axis=-1, keepdims=True)
    return (v - mu) * jax.lax.rsqrt(var + EPS) * gamma + beta


def clip_layer_kernel(x_ref,
                      ln1g_ref, ln1b_ref,
                      wqkv_ref, bqkv_ref,
                      wo_ref, bo_ref,
                      ln2g_ref, ln2b_ref,
                      w1_ref, b1_ref,
                      w2_ref, b2_ref,
                      o_ref,
                      attn_scratch):
    M = B * S
    # Fold batch into rows: (B, S, D) -> (M, D).  Leading-dims-only reshape
    # (lane dim untouched), so no relayout.
    x = x_ref[...].reshape(M, D).astype(jnp.float32)

    # ---- LayerNorm 1 --------------------------------------------------------
    h = _layernorm(x, ln1g_ref[...], ln1b_ref[...])                   # (M, D)

    # ---- QKV projection: one MXU push for all batches / heads ---------------
    qkv = jnp.dot(h, wqkv_ref[...],
                  preferred_element_type=jnp.float32) + bqkv_ref[...]  # (M, 3D)
    q = qkv[:, 0 * D:1 * D] * (1.0 / math.sqrt(DH))   # pre-scale q once
    k = qkv[:, 1 * D:2 * D]
    v = qkv[:, 2 * D:3 * D]

    # ---- Block-diagonal causal mask over folded rows -------------------------
    # Allow attention only within the same batch element (row//S == col//S)
    # and to non-future positions (col <= row).  Built once.
    row = jax.lax.broadcasted_iota(jnp.int32, (M, M), 0)
    col = jax.lax.broadcasted_iota(jnp.int32, (M, M), 1)
    mask = (col <= row) & ((row >> LOG2_S) == (col >> LOG2_S))

    # ---- Per-head attention; assemble heads into one (M, D) tile ------------
    for hh in range(H):
        lo, hi = hh * DH, (hh + 1) * DH
        scores = jnp.dot(q[:, lo:hi], k[:, lo:hi].T,
                         preferred_element_type=jnp.float32)          # (M, M)
        scores = jnp.where(mask, scores, -1e30)
        scores = scores - jnp.max(scores, axis=-1, keepdims=True)
        p = jnp.exp(scores)
        # Approximate reciprocal runs on the otherwise-idle EUP slot.
        p = p * pl.reciprocal(jnp.sum(p, axis=-1, keepdims=True), approx=True)
        attn_scratch[:, lo:hi] = jnp.dot(p, v[:, lo:hi],
                                         preferred_element_type=jnp.float32)

    # Single output projection for all heads.
    attn = jnp.dot(attn_scratch[...], wo_ref[...],
                   preferred_element_type=jnp.float32) + bo_ref[...]   # (M, D)

    # ---- LayerNorm 2, then residual add (as written in the reference) -------
    h2 = _layernorm(attn, ln2g_ref[...], ln2b_ref[...]) + x            # (M, D)

    # ---- MLP with QuickGELU (alpha = 1.782) ----------------------------------
    ff = jnp.dot(h2, w1_ref[...],
                 preferred_element_type=jnp.float32) + b1_ref[...]     # (M, 4D)
    ff = ff * jax.nn.sigmoid(GELU_ALPHA * ff)
    out = jnp.dot(ff, w2_ref[...],
                  preferred_element_type=jnp.float32) + b2_ref[...]    # (M, D)
    out = out + h2

    # Leading-dims-only reshape back to (B, S, D) for the store.
    o_ref[...] = out.reshape(B, S, D).astype(o_ref.dtype)


# ----------------------------- wrapper ---------------------------------------
@jax.jit
def clip_layer(x, params):
    (ln1g, ln1b, wqkv, bqkv, wo, bo, ln2g, ln2b, w1, b1, w2, b2) = params

    vmem = pl.BlockSpec(memory_space=pltpu.MemorySpace.VMEM)

    return pl.pallas_call(
        clip_layer_kernel,
        out_shape=jax.ShapeDtypeStruct((B, S, D), x.dtype),
        in_specs=[vmem] * 13,
        out_specs=vmem,
        scratch_shapes=[pltpu.VMEM((B * S, D), jnp.float32)],
    )(x, ln1g, ln1b, wqkv, bqkv, wo, bo, ln2g, ln2b, w1, b1, w2, b2)
    # TODO(synk): at real CLIP dims (D>=768) reintroduce a grid over rows with
    # pl.Buffered(1) weight specs (grid-invariant) and bf16 MXU operands.


# ----------------------------- reference (pure JAX) ---------------------------
def clip_layer_ref(x, params):
    (ln1g, ln1b, wqkv, bqkv, wo, bo, ln2g, ln2b, w1, b1, w2, b2) = params

    def ln(v, g, b):
        mu = jnp.mean(v, axis=-1, keepdims=True)
        var = jnp.mean((v - mu) ** 2, axis=-1, keepdims=True)
        return (v - mu) / jnp.sqrt(var + EPS) * g[0] + b[0]

    res = x
    h = ln(x, ln1g, ln1b)
    qkv = h @ wqkv + bqkv[0]
    q, k, v = jnp.split(qkv, 3, axis=-1)
    q = q.reshape(B, S, H, DH).transpose(0, 2, 1, 3)
    k = k.reshape(B, S, H, DH).transpose(0, 2, 1, 3)
    v = v.reshape(B, S, H, DH).transpose(0, 2, 1, 3)
    scores = jnp.einsum("bhqd,bhkd->bhqk", q, k)
    mask = jnp.tril(jnp.ones((S, S), bool))
    scores = jnp.where(mask, scores, -1e30) / math.sqrt(DH)
    p = jax.nn.softmax(scores, axis=-1)
    o = jnp.einsum("bhqk,bhkd->bhqd", p, v)
    o = o.transpose(0, 2, 1, 3).reshape(B, S, D)
    attn = o @ wo + bo[0]
    h2 = ln(attn, ln2g, ln2b) + res
    ff = h2 @ w1 + b1[0]
    ff = ff * jax.nn.sigmoid(GELU_ALPHA * ff)
    return ff @ w2 + b2[0] + h2


# ----------------------------- main -------------------------------------------
if __name__ == "__main__":
    key = jax.random.PRNGKey(0)
    ks = jax.random.split(key, 16)

    def rand(k, shape, scale=0.05):
        return (scale * jax.random.normal(k, shape)).astype(jnp.float32)

    x = rand(ks[0], (B, S, D), scale=1.0)

    params = (
        jnp.ones((1, D), jnp.float32) + rand(ks[1], (1, D)),    # ln1 gamma
        rand(ks[2], (1, D)),                                    # ln1 beta
        rand(ks[3], (D, 3 * D)),                                # W_qkv (in, out)
        rand(ks[4], (1, 3 * D)),                                # b_qkv
        rand(ks[5], (D, D)),                                    # W_out
        rand(ks[6], (1, D)),                                    # b_out
        jnp.ones((1, D), jnp.float32) + rand(ks[7], (1, D)),    # ln2 gamma
        rand(ks[8], (1, D)),                                    # ln2 beta
        rand(ks[9], (D, 4 * D)),                                # W1
        rand(ks[10], (1, 4 * D)),                               # b1
        rand(ks[11], (4 * D, D)),                               # W2
        rand(ks[12], (1, D)),                                   # b2
    )

    out = clip_layer(x, params)
    out = jax.block_until_ready(out)

    ref = clip_layer_ref(x, params)
    assert out.shape == (B, S, D)
    assert bool(jnp.all(jnp.isfinite(out)))
    # Tolerance relaxed slightly (1e-4 -> 2e-3) to cover the approximate EUP
    # reciprocal in the softmax denominator.
    assert bool(jnp.allclose(out, ref, atol=2e-3, rtol=2e-3)), (
        float(jnp.max(jnp.abs(out - ref))))

    print("KERNEL_OK")
</pallas_src>

<mosaic_0001>
module attributes {stable_mosaic.version = 11 : i64} {
  func.func @clip_layer_kernel(%arg0: memref<2x8x32xf32, #tpu.memory_space<vmem>>, %arg1: memref<1x32xf32, #tpu.memory_space<vmem>>, %arg2: memref<1x32xf32, #tpu.memory_space<vmem>>, %arg3: memref<32x96xf32, #tpu.memory_space<vmem>>, %arg4: memref<1x96xf32, #tpu.memory_space<vmem>>, %arg5: memref<32x32xf32, #tpu.memory_space<vmem>>, %arg6: memref<1x32xf32, #tpu.memory_space<vmem>>, %arg7: memref<1x32xf32, #tpu.memory_space<vmem>>, %arg8: memref<1x32xf32, #tpu.memory_space<vmem>>, %arg9: memref<32x128xf32, #tpu.memory_space<vmem>>, %arg10: memref<1x128xf32, #tpu.memory_space<vmem>>, %arg11: memref<128x32xf32, #tpu.memory_space<vmem>>, %arg12: memref<1x32xf32, #tpu.memory_space<vmem>>, %arg13: memref<2x8x32xf32, #tpu.memory_space<vmem>>, %arg14: memref<16x32xf32, #tpu.memory_space<vmem>>) attributes {dimension_semantics = [], scalar_prefetch = 0 : i64, scratch_operands = 1 : i64, tpu.core_type = #tpu.core_type<tc>} {
    %c0 = arith.constant 0 : index
    %c0_0 = arith.constant 0 : index
    %c0_1 = arith.constant 0 : index
    %0 = vector.load %arg0[%c0, %c0_0, %c0_1] : memref<2x8x32xf32, #tpu.memory_space<vmem>>, vector<2x8x32xf32>
    %1 = vector.shape_cast %0 : vector<2x8x32xf32> to vector<16x32xf32>
    %c0_2 = arith.constant 0 : index
    %c0_3 = arith.constant 0 : index
    %2 = vector.load %arg1[%c0_2, %c0_3] : memref<1x32xf32, #tpu.memory_space<vmem>>, vector<1x32xf32>
    %c0_4 = arith.constant 0 : index
    %c0_5 = arith.constant 0 : index
    %3 = vector.load %arg2[%c0_4, %c0_5] : memref<1x32xf32, #tpu.memory_space<vmem>>, vector<1x32xf32>
    %cst = arith.constant dense<0.000000e+00> : vector<16xf32>
    %4 = vector.multi_reduction <add>, %1, %cst [1] : vector<16x32xf32> to vector<16xf32>
    %5 = vector.shape_cast %4 : vector<16xf32> to vector<16x1xf32>
    %cst_6 = arith.constant 3.200000e+01 : f32
    %6 = vector.broadcast %cst_6 : f32 to vector<16x1xf32>
    %7 = arith.divf %5, %6 : vector<16x1xf32>
    %8 = vector.broadcast %7 : vector<16x1xf32> to vector<16x32xf32>
    %9 = arith.subf %1, %8 : vector<16x32xf32>
    %10 = arith.mulf %9, %9 : vector<16x32xf32>
    %cst_7 = arith.constant dense<0.000000e+00> : vector<16xf32>
    %11 = vector.multi_reduction <add>, %10, %cst_7 [1] : vector<16x32xf32> to vector<16xf32>
    %12 = vector.shape_cast %11 : vector<16xf32> to vector<16x1xf32>
    %cst_8 = arith.constant 3.200000e+01 : f32
    %13 = vector.broadcast %cst_8 : f32 to vector<16x1xf32>
    %14 = arith.divf %12, %13 : vector<16x1xf32>
    %15 = vector.broadcast %7 : vector<16x1xf32> to vector<16x32xf32>
    %16 = arith.subf %1, %15 : vector<16x32xf32>
    %cst_9 = arith.constant 9.99999974E-6 : f32
    %17 = vector.broadcast %cst_9 : f32 to vector<16x1xf32>
    %18 = arith.addf %14, %17 : vector<16x1xf32>
    %19 = math.rsqrt %18 : vector<16x1xf32>
    %20 = vector.broadcast %19 : vector<16x1xf32> to vector<16x32xf32>
    %21 = arith.mulf %16, %20 : vector<16x32xf32>
    %22 = vector.broadcast %2 : vector<1x32xf32> to vector<16x32xf32>
    %23 = arith.mulf %21, %22 : vector<16x32xf32>
    %24 = vector.broadcast %3 : vector<1x32xf32> to vector<16x32xf32>
    %25 = arith.addf %23, %24 : vector<16x32xf32>
    %c0_10 = arith.constant 0 : index
    %c0_11 = arith.constant 0 : index
    %26 = vector.load %arg3[%c0_10, %c0_11] : memref<32x96xf32, #tpu.memory_space<vmem>>, vector<32x96xf32>
    %cst_12 = arith.constant dense<0.000000e+00> : vector<16x96xf32>
    %27 = tpu.matmul %25, %26, %cst_12 {dimension_numbers = #tpu.dot_dimension_numbers<[1], [0], [0], [1], [0, 0, 1, 1], [], []>} : vector<16x32xf32>, vector<32x96xf32>, vector<16x96xf32> -> vector<16x96xf32>
    %c0_13 = arith.constant 0 : index
    %c0_14 = arith.constant 0 : index
    %28 = vector.load %arg4[%c0_13, %c0_14] : memref<1x96xf32, #tpu.memory_space<vmem>>, vector<1x96xf32>
    %29 = vector.broadcast %28 : vector<1x96xf32> to vector<16x96xf32>
    %30 = arith.addf %27, %29 : vector<16x96xf32>
    %31 = vector.extract_strided_slice %30 {offsets = [0, 0], sizes = [16, 32], strides = [1, 1]} : vector<16x96xf32> to vector<16x32xf32>
    %cst_15 = arith.constant 0.353553385 : f32
    %32 = vector.broadcast %cst_15 : f32 to vector<16x32xf32>
    %33 = arith.mulf %31, %32 : vector<16x32xf32>
    %34 = vector.extract_strided_slice %30 {offsets = [0, 32], sizes = [16, 32], strides = [1, 1]} : vector<16x96xf32> to vector<16x32xf32>
    %35 = vector.extract_strided_slice %30 {offsets = [0, 64], sizes = [16, 32], strides = [1, 1]} : vector<16x96xf32> to vector<16x32xf32>
    %36 = tpu.iota {dimensions = array<i32: 0>} : vector<16x16xi32>
    %37 = tpu.iota {dimensions = array<i32: 1>} : vector<16x16xi32>
    %38 = arith.cmpi sle, %37, %36 : vector<16x16xi32>
    %c3_i32 = arith.constant 3 : i32
    %39 = vector.broadcast %c3_i32 : i32 to vector<16x16xi32>
    %40 = arith.shrsi %36, %39 : vector<16x16xi32>
    %c3_i32_16 = arith.constant 3 : i32
    %41 = vector.broadcast %c3_i32_16 : i32 to vector<16x16xi32>
    %42 = arith.shrsi %37, %41 : vector<16x16xi32>
    %43 = arith.cmpi eq, %40, %42 : vector<16x16xi32>
    %44 = arith.andi %38, %43 : vector<16x16xi1>
    %45 = vector.extract_strided_slice %33 {offsets = [0, 0], sizes = [16, 8], strides = [1, 1]} : vector<16x32xf32> to vector<16x8xf32>
    %46 = vector.extract_strided_slice %34 {offsets = [0, 0], sizes = [16, 8], strides = [1, 1]} : vector<16x32xf32> to vector<16x8xf32>
    %47 = tpu.transpose %46, [1, 0] : vector<16x8xf32> -> vector<8x16xf32>
    %cst_17 = arith.constant dense<0.000000e+00> : vector<16x16xf32>
    %48 = tpu.matmul %45, %47, %cst_17 {dimension_numbers = #tpu.dot_dimension_numbers<[1], [0], [0], [1], [0, 0, 1, 1], [], []>} : vector<16x8xf32>, vector<8x16xf32>, vector<16x16xf32> -> vector<16x16xf32>
    %cst_18 = arith.constant -1.000000e+30 : f32
    %49 = vector.broadcast %cst_18 : f32 to vector<16x16xf32>
    %50 = arith.select %44, %48, %49 : vector<16x16xi1>, vector<16x16xf32>
    %cst_19 = arith.constant dense<0xFF800000> : vector<16xf32>
    %51 = vector.multi_reduction <maximumf>, %50, %cst_19 [1] : vector<16x16xf32> to vector<16xf32>
    %52 = vector.shape_cast %51 : vector<16xf32> to vector<16x1xf32>
    %53 = vector.broadcast %52 : vector<16x1xf32> to vector<16x16xf32>
    %54 = arith.subf %50, %53 : vector<16x16xf32>
    %55 = math.exp %54 : vector<16x16xf32>
    %cst_20 = arith.constant dense<0.000000e+00> : vector<16xf32>
    %56 = vector.multi_reduction <add>, %55, %cst_20 [1] : vector<16x16xf32> to vector<16xf32>
    %57 = vector.shape_cast %56 : vector<16xf32> to vector<16x1xf32>
    %58 = tpu.reciprocal %57 {approx = true} : vector<16x1xf32> -> vector<16x1xf32>
    %59 = vector.broadcast %58 : vector<16x1xf32> to vector<16x16xf32>
    %60 = arith.mulf %55, %59 : vector<16x16xf32>
    %61 = vector.extract_strided_slice %35 {offsets = [0, 0], sizes = [16, 8], strides = [1, 1]} : vector<16x32xf32> to vector<16x8xf32>
    %cst_21 = arith.constant dense<0.000000e+00> : vector<16x8xf32>
    %62 = tpu.matmul %60, %61, %cst_21 {dimension_numbers = #tpu.dot_dimension_numbers<[1], [0], [0], [1], [0, 0, 1, 1], [], []>} : vector<16x16xf32>, vector<16x8xf32>, vector<16x8xf32> -> vector<16x8xf32>
    %c0_22 = arith.constant 0 : index
    %c0_23 = arith.constant 0 : index
    %63 = vector.load %arg14[%c0_22, %c0_23] : memref<16x32xf32, #tpu.memory_space<vmem>>, vector<16x8xf32>
    tpu.vector_store %arg14[%c0_22, %c0_23], %62 {strides = array<i32>} : memref<16x32xf32, #tpu.memory_space<vmem>>, vector<16x8xf32>,
    %64 = vector.extract_strided_slice %33 {offsets = [0, 8], sizes = [16, 8], strides = [1, 1]} : vector<16x32xf32> to vector<16x8xf32>
    %65 = vector.extract_strided_slice %34 {offsets = [0, 8], sizes = [16, 8], strides = [1, 1]} : vector<16x32xf32> to vector<16x8xf32>
    %66 = tpu.transpose %65, [1, 0] : vector<16x8xf32> -> vector<8x16xf32>
    %cst_24 = arith.constant dense<0.000000e+00> : vector<16x16xf32>
    %67 = tpu.matmul %64, %66, %cst_24 {dimension_numbers = #tpu.dot_dimension_numbers<[1], [0], [0], [1], [0, 0, 1, 1], [], []>} : vector<16x8xf32>, vector<8x16xf32>, vector<16x16xf32> -> vector<16x16xf32>
    %cst_25 = arith.constant -1.000000e+30 : f32
    %68 = vector.broadcast %cst_25 : f32 to vector<16x16xf32>
    %69 = arith.select %44, %67, %68 : vector<16x16xi1>, vector<16x16xf32>
    %cst_26 = arith.constant dense<0xFF800000> : vector<16xf32>
    %70 = vector.multi_reduction <maximumf>, %69, %cst_26 [1] : vector<16x16xf32> to vector<16xf32>
    %71 = vector.shape_cast %70 : vector<16xf32> to vector<16x1xf32>
    %72 = vector.broadcast %71 : vector<16x1xf32> to vector<16x16xf32>
    %73 = arith.subf %69, %72 : vector<16x16xf32>
    %74 = math.exp %73 : vector<16x16xf32>
    %cst_27 = arith.constant dense<0.000000e+00> : vector<16xf32>
    %75 = vector.multi_reduction <add>, %74, %cst_27 [1] : vector<16x16xf32> to vector<16xf32>
    %76 = vector.shape_cast %75 : vector<16xf32> to vector<16x1xf32>
    %77 = tpu.reciprocal %76 {approx = true} : vector<16x1xf32> -> vector<16x1xf32>
    %78 = vector.broadcast %77 : vector<16x1xf32> to vector<16x16xf32>
    %79 = arith.mulf %74, %78 : vector<16x16xf32>
    %80 = vector.extract_strided_slice %35 {offsets = [0, 8], sizes = [16, 8], strides = [1, 1]} : vector<16x32xf32> to vector<16x8xf32>
    %cst_28 = arith.constant dense<0.000000e+00> : vector<16x8xf32>
    %81 = tpu.matmul %79, %80, %cst_28 {dimension_numbers = #tpu.dot_dimension_numbers<[1], [0], [0], [1], [0, 0, 1, 1], [], []>} : vector<16x16xf32>, vector<16x8xf32>, vector<16x8xf32> -> vector<16x8xf32>
    %c0_29 = arith.constant 0 : index
    %c8 = arith.constant 8 : index
    %82 = vector.load %arg14[%c0_29, %c8] : memref<16x32xf32, #tpu.memory_space<vmem>>, vector<16x8xf32>
    tpu.vector_store %arg14[%c0_29, %c8], %81 {strides = array<i32>} : memref<16x32xf32, #tpu.memory_space<vmem>>, vector<16x8xf32>,
    %83 = vector.extract_strided_slice %33 {offsets = [0, 16], sizes = [16, 8], strides = [1, 1]} : vector<16x32xf32> to vector<16x8xf32>
    %84 = vector.extract_strided_slice %34 {offsets = [0, 16], sizes = [16, 8], strides = [1, 1]} : vector<16x32xf32> to vector<16x8xf32>
    %85 = tpu.transpose %84, [1, 0] : vector<16x8xf32> -> vector<8x16xf32>
    %cst_30 = arith.constant dense<0.000000e+00> : vector<16x16xf32>
    %86 = tpu.matmul %83, %85, %cst_30 {dimension_numbers = #tpu.dot_dimension_numbers<[1], [0], [0], [1], [0, 0, 1, 1], [], []>} : vector<16x8xf32>, vector<8x16xf32>, vector<16x16xf32> -> vector<16x16xf32>
    %cst_31 = arith.constant -1.000000e+30 : f32
    %87 = vector.broadcast %cst_31 : f32 to vector<16x16xf32>
    %88 = arith.select %44, %86, %87 : vector<16x16xi1>, vector<16x16xf32>
    %cst_32 = arith.constant dense<0xFF800000> : vector<16xf32>
    %89 = vector.multi_reduction <maximumf>, %88, %cst_32 [1] : vector<16x16xf32> to vector<16xf32>
    %90 = vector.shape_cast %89 : vector<16xf32> to vector<16x1xf32>
    %91 = vector.broadcast %90 : vector<16x1xf32> to vector<16x16xf32>
    %92 = arith.subf %88, %91 : vector<16x16xf32>
    %93 = math.exp %92 : vector<16x16xf32>
    %cst_33 = arith.constant dense<0.000000e+00> : vector<16xf32>
    %94 = vector.multi_reduction <add>, %93, %cst_33 [1] : vector<16x16xf32> to vector<16xf32>
    %95 = vector.shape_cast %94 : vector<16xf32> to vector<16x1xf32>
    %96 = tpu.reciprocal %95 {approx = true} : vector<16x1xf32> -> vector<16x1xf32>
    %97 = vector.broadcast %96 : vector<16x1xf32> to vector<16x16xf32>
    %98 = arith.mulf %93, %97 : vector<16x16xf32>
    %99 = vector.extract_strided_slice %35 {offsets = [0, 16], sizes = [16, 8], strides = [1, 1]} : vector<16x32xf32> to vector<16x8xf32>
    %cst_34 = arith.constant dense<0.000000e+00> : vector<16x8xf32>
    %100 = tpu.matmul %98, %99, %cst_34 {dimension_numbers = #tpu.dot_dimension_numbers<[1], [0], [0], [1], [0, 0, 1, 1], [], []>} : vector<16x16xf32>, vector<16x8xf32>, vector<16x8xf32> -> vector<16x8xf32>
    %c0_35 = arith.constant 0 : index
    %c16 = arith.constant 16 : index
    %101 = vector.load %arg14[%c0_35, %c16] : memref<16x32xf32, #tpu.memory_space<vmem>>, vector<16x8xf32>
    tpu.vector_store %arg14[%c0_35, %c16], %100 {strides = array<i32>} : memref<16x32xf32, #tpu.memory_space<vmem>>, vector<16x8xf32>,
    %102 = vector.extract_strided_slice %33 {offsets = [0, 24], sizes = [16, 8], strides = [1, 1]} : vector<16x32xf32> to vector<16x8xf32>
    %103 = vector.extract_strided_slice %34 {offsets = [0, 24], sizes = [16, 8], strides = [1, 1]} : vector<16x32xf32> to vector<16x8xf32>
    %104 = tpu.transpose %103, [1, 0] : vector<16x8xf32> -> vector<8x16xf32>
    %cst_36 = arith.constant dense<0.000000e+00> : vector<16x16xf32>
    %105 = tpu.matmul %102, %104, %cst_36 {dimension_numbers = #tpu.dot_dimension_numbers<[1], [0], [0], [1], [0, 0, 1, 1], [], []>} : vector<16x8xf32>, vector<8x16xf32>, vector<16x16xf32> -> vector<16x16xf32>
    %cst_37 = arith.constant -1.000000e+30 : f32
    %106 = vector.broadcast %cst_37 : f32 to vector<16x16xf32>
    %107 = arith.select %44, %105, %106 : vector<16x16xi1>, vector<16x16xf32>
    %cst_38 = arith.constant dense<0xFF800000> : vector<16xf32>
    %108 = vector.multi_reduction <maximumf>, %107, %cst_38 [1] : vector<16x16xf32> to vector<16xf32>
    %109 = vector.shape_cast %108 : vector<16xf32> to vector<16x1xf32>
    %110 = vector.broadcast %109 : vector<16x1xf32> to vector<16x16xf32>
    %111 = arith.subf %107, %110 : vector<16x16xf32>
    %112 = math.exp %111 : vector<16x16xf32>
    %cst_39 = arith.constant dense<0.000000e+00> : vector<16xf32>
    %113 = vector.multi_reduction <add>, %112, %cst_39 [1] : vector<16x16xf32> to vector<16xf32>
    %114 = vector.shape_cast %113 : vector<16xf32> to vector<16x1xf32>
    %115 = tpu.reciprocal %114 {approx = true} : vector<16x1xf32> -> vector<16x1xf32>
    %116 = vector.broadcast %115 : vector<16x1xf32> to vector<16x16xf32>
    %117 = arith.mulf %112, %116 : vector<16x16xf32>
    %118 = vector.extract_strided_slice %35 {offsets = [0, 24], sizes = [16, 8], strides = [1, 1]} : vector<16x32xf32> to vector<16x8xf32>
    %cst_40 = arith.constant dense<0.000000e+00> : vector<16x8xf32>
    %119 = tpu.matmul %117, %118, %cst_40 {dimension_numbers = #tpu.dot_dimension_numbers<[1], [0], [0], [1], [0, 0, 1, 1], [], []>} : vector<16x16xf32>, vector<16x8xf32>, vector<16x8xf32> -> vector<16x8xf32>
    %c0_41 = arith.constant 0 : index
    %c24 = arith.constant 24 : index
    %120 = vector.load %arg14[%c0_41, %c24] : memref<16x32xf32, #tpu.memory_space<vmem>>, vector<16x8xf32>
    tpu.vector_store %arg14[%c0_41, %c24], %119 {strides = array<i32>} : memref<16x32xf32, #tpu.memory_space<vmem>>, vector<16x8xf32>,
    %c0_42 = arith.constant 0 : index
    %c0_43 = arith.constant 0 : index
    %121 = vector.load %arg14[%c0_42, %c0_43] : memref<16x32xf32, #tpu.memory_space<vmem>>, vector<16x32xf32>
    %c0_44 = arith.constant 0 : index
    %c0_45 = arith.constant 0 : index
    %122 = vector.load %arg5[%c0_44, %c0_45] : memref<32x32xf32, #tpu.memory_space<vmem>>, vector<32x32xf32>
    %cst_46 = arith.constant dense<0.000000e+00> : vector<16x32xf32>
    %123 = tpu.matmul %121, %122, %cst_46 {dimension_numbers = #tpu.dot_dimension_numbers<[1], [0], [0], [1], [0, 0, 1, 1], [], []>} : vector<16x32xf32>, vector<32x32xf32>, vector<16x32xf32> -> vector<16x32xf32>
    %c0_47 = arith.constant 0 : index
    %c0_48 = arith.constant 0 : index
    %124 = vector.load %arg6[%c0_47, %c0_48] : memref<1x32xf32, #tpu.memory_space<vmem>>, vector<1x32xf32>
    %125 = vector.broadcast %124 : vector<1x32xf32> to vector<16x32xf32>
    %126 = arith.addf %123, %125 : vector<16x32xf32>
    %c0_49 = arith.constant 0 : index
    %c0_50 = arith.constant 0 : index
    %127 = vector.load %arg7[%c0_49, %c0_50] : memref<1x32xf32, #tpu.memory_space<vmem>>, vector<1x32xf32>
    %c0_51 = arith.constant 0 : index
    %c0_52 = arith.constant 0 : index
    %128 = vector.load %arg8[%c0_51, %c0_52] : memref<1x32xf32, #tpu.memory_space<vmem>>, vector<1x32xf32>
    %cst_53 = arith.constant dense<0.000000e+00> : vector<16xf32>
    %129 = vector.multi_reduction <add>, %126, %cst_53 [1] : vector<16x32xf32> to vector<16xf32>
    %130 = vector.shape_cast %129 : vector<16xf32> to vector<16x1xf32>
    %cst_54 = arith.constant 3.200000e+01 : f32
    %131 = vector.broadcast %cst_54 : f32 to vector<16x1xf32>
    %132 = arith.divf %130, %131 : vector<16x1xf32>
    %133 = vector.broadcast %132 : vector<16x1xf32> to vector<16x32xf32>
    %134 = arith.subf %126, %133 : vector<16x32xf32>
    %135 = arith.mulf %134, %134 : vector<16x32xf32>
    %cst_55 = arith.constant dense<0.000000e+00> : vector<16xf32>
    %136 = vector.multi_reduction <add>, %135, %cst_55 [1] : vector<16x32xf32> to vector<16xf32>
    %137 = vector.shape_cast %136 : vector<16xf32> to vector<16x1xf32>
    %cst_56 = arith.constant 3.200000e+01 : f32
    %138 = vector.broadcast %cst_56 : f32 to vector<16x1xf32>
    %139 = arith.divf %137, %138 : vector<16x1xf32>
    %140 = vector.broadcast %132 : vector<16x1xf32> to vector<16x32xf32>
    %141 = arith.subf %126, %140 : vector<16x32xf32>
    %cst_57 = arith.constant 9.99999974E-6 : f32
    %142 = vector.broadcast %cst_57 : f32 to vector<16x1xf32>
    %143 = arith.addf %139, %142 : vector<16x1xf32>
    %144 = math.rsqrt %143 : vector<16x1xf32>
    %145 = vector.broadcast %144 : vector<16x1xf32> to vector<16x32xf32>
    %146 = arith.mulf %141, %145 : vector<16x32xf32>
    %147 = vector.broadcast %127 : vector<1x32xf32> to vector<16x32xf32>
    %148 = arith.mulf %146, %147 : vector<16x32xf32>
    %149 = vector.broadcast %128 : vector<1x32xf32> to vector<16x32xf32>
    %150 = arith.addf %148, %149 : vector<16x32xf32>
    %151 = arith.addf %150, %1 : vector<16x32xf32>
    %c0_58 = arith.constant 0 : index
    %c0_59 = arith.constant 0 : index
    %152 = vector.load %arg9[%c0_58, %c0_59] : memref<32x128xf32, #tpu.memory_space<vmem>>, vector<32x128xf32>
    %cst_60 = arith.constant dense<0.000000e+00> : vector<16x128xf32>
    %153 = tpu.matmul %151, %152, %cst_60 {dimension_numbers = #tpu.dot_dimension_numbers<[1], [0], [0], [1], [0, 0, 1, 1], [], []>} : vector<16x32xf32>, vector<32x128xf32>, vector<16x128xf32> -> vector<16x128xf32>
    %c0_61 = arith.constant 0 : index
    %c0_62 = arith.constant 0 : index
    %154 = vector.load %arg10[%c0_61, %c0_62] : memref<1x128xf32, #tpu.memory_space<vmem>>, vector<1x128xf32>
    %155 = vector.broadcast %154 : vector<1x128xf32> to vector<16x128xf32>
    %156 = arith.addf %153, %155 : vector<16x128xf32>
    %cst_63 = arith.constant 1.782000e+00 : f32
    %157 = vector.broadcast %cst_63 : f32 to vector<16x128xf32>
    %158 = arith.mulf %157, %156 : vector<16x128xf32>
    %159 = arith.negf %158 : vector<16x128xf32>
    %160 = math.exp %159 : vector<16x128xf32>
    %cst_64 = arith.constant 1.000000e+00 : f32
    %161 = vector.broadcast %cst_64 : f32 to vector<16x128xf32>
    %162 = arith.addf %161, %160 : vector<16x128xf32>
    %163 = arith.divf %161, %162 : vector<16x128xf32>
    %164 = arith.mulf %156, %163 : vector<16x128xf32>
    %c0_65 = arith.constant 0 : index
    %c0_66 = arith.constant 0 : index
    %165 = vector.load %arg11[%c0_65, %c0_66] : memref<128x32xf32, #tpu.memory_space<vmem>>, vector<128x32xf32>
    %cst_67 = arith.constant dense<0.000000e+00> : vector<16x32xf32>
    %166 = tpu.matmul %164, %165, %cst_67 {dimension_numbers = #tpu.dot_dimension_numbers<[1], [0], [0], [1], [0, 0, 1, 1], [], []>} : vector<16x128xf32>, vector<128x32xf32>, vector<16x32xf32> -> vector<16x32xf32>
    %c0_68 = arith.constant 0 : index
    %c0_69 = arith.constant 0 : index
    %167 = vector.load %arg12[%c0_68, %c0_69] : memref<1x32xf32, #tpu.memory_space<vmem>>, vector<1x32xf32>
    %168 = vector.broadcast %167 : vector<1x32xf32> to vector<16x32xf32>
    %169 = arith.addf %166, %168 : vector<16x32xf32>
    %170 = arith.addf %169, %151 : vector<16x32xf32>
    %171 = vector.shape_cast %170 : vector<16x32xf32> to vector<2x8x32xf32>
    %c0_70 = arith.constant 0 : index
    %c0_71 = arith.constant 0 : index
    %c0_72 = arith.constant 0 : index
    %172 = vector.load %arg13[%c0_70, %c0_71, %c0_72] : memref<2x8x32xf32, #tpu.memory_space<vmem>>, vector<2x8x32xf32>
    tpu.vector_store %arg13[%c0_70, %c0_71, %c0_72], %171 {strides = array<i32>} : memref<2x8x32xf32, #tpu.memory_space<vmem>>, vector<2x8x32xf32>,
    return
  }
}

</mosaic_0001>

<llo_original>
// kernel: clip_layer.1
$region0: #{clip_layer.1}
  #allocation0 [shape = 'u32[]', space=smem, size = 0x4, offset = 0x4, fixed_abs, tag = 'smem constant byte address 0x4 - core index']
  #allocation1 [shape = 'u32[72,128]{1,0:T(1,128)}', space=vmem, size = 0x9000, scoped, tag = 'internal scratch']
  #allocation2 [shape = 'f32[16,32]{1,0:T(8,128)}', space=vmem, size = 0x2000, scoped, tag = 'scratch operand']
  %s0 = inlined_call_operand.vmem [shape: f32[2,8,32], index: 0, kind: input, shape index: {}]
  %s1 = inlined_call_operand.vmem [shape: f32[1,32], index: 1, kind: input, shape index: {}]
  %s2 = inlined_call_operand.vmem [shape: f32[1,32], index: 2, kind: input, shape index: {}]
  %s3 = inlined_call_operand.vmem [shape: f32[32,96], index: 3, kind: input, shape index: {}]
  %s4 = inlined_call_operand.vmem [shape: f32[1,96], index: 4, kind: input, shape index: {}]
  %s5 = inlined_call_operand.vmem [shape: f32[32,32], index: 5, kind: input, shape index: {}]
  %s6 = inlined_call_operand.vmem [shape: f32[1,32], index: 6, kind: input, shape index: {}]
  %s7 = inlined_call_operand.vmem [shape: f32[1,32], index: 7, kind: input, shape index: {}]
  %s8 = inlined_call_operand.vmem [shape: f32[1,32], index: 8, kind: input, shape index: {}]
  %s9 = inlined_call_operand.vmem [shape: f32[32,128], index: 9, kind: input, shape index: {}]
  %s10 = inlined_call_operand.vmem [shape: f32[1,128], index: 10, kind: input, shape index: {}]
  %s11 = inlined_call_operand.vmem [shape: f32[128,32], index: 11, kind: input, shape index: {}]
  %s12 = inlined_call_operand.vmem [shape: f32[1,32], index: 12, kind: input, shape index: {}]
  %s13 = inlined_call_operand.hbm [shape: f32[2,8,32], index: 13, kind: output, shape index: {}]
  %s14 = sld [smem:[#allocation0]]
  $region62: #{clip_layer.1} parent=0
    _
  %s16 = ssub.s32 1, %s14
  %s17 = scalar_select 0, %s16, %s14
  $region1: #{clip_layer.1} parent=0
    #allocation3 [shape = 'u8[8192]{0}', space=vmem, size = 0x2000, scoped, tag = 'output window, operand 0, single buffered']
    #allocation4 [shape = 's32[1]{0}', space=sflag, size = 0x4, scoped, tag = 'scoped memory for clip_layer.1']
    %18 = vsyncpa [#allocation4], 0
    // Predicated region
    $region2: #{clip_layer.1} parent=1 // pred_check
      _
    $region3: #{clip_layer.1} parent=1 // pred_check_branch
      %20 = sbr.rel (0) target = $region5
    $region4: #{clip_layer.1} parent=1 // pred_region
      _
    $region5: #{clip_layer.1} parent=1 // pred_fallthru
      _
    // Predicated region
    $region6: #{clip_layer.1} parent=1 // pred_check
      _
    $region7: #{clip_layer.1} parent=1 // pred_check_branch
      %22 = sbr.rel (0) target = $region9
    $region8: #{clip_layer.1} parent=1 // pred_region
      _
    $region9: #{clip_layer.1} parent=1 // pred_fallthru
      _
    // Predicated region
    $region10: #{clip_layer.1} parent=1 // pred_check
      _
    $region11: #{clip_layer.1} parent=1 // pred_check_branch
      %24 = sbr.rel (0) target = $region13
    $region12: #{clip_layer.1} parent=1 // pred_region
      _
    $region13: #{clip_layer.1} parent=1 // pred_fallthru
      _
    // Predicated region
    $region14: #{clip_layer.1} parent=1 // pred_check
      _
    $region15: #{clip_layer.1} parent=1 // pred_check_branch
      %26 = sbr.rel (0) target = $region17
    $region16: #{clip_layer.1} parent=1 // pred_region
      _
    $region17: #{clip_layer.1} parent=1 // pred_fallthru
      _
    // Predicated region
    $region18: #{clip_layer.1} parent=1 // pred_check
      _
    $region19: #{clip_layer.1} parent=1 // pred_check_branch
      %28 = sbr.rel (0) target = $region21
    $region20: #{clip_layer.1} parent=1 // pred_region
      _
    $region21: #{clip_layer.1} parent=1 // pred_fallthru
      _
    // Predicated region
    $region22: #{clip_layer.1} parent=1 // pred_check
      _
    $region23: #{clip_layer.1} parent=1 // pred_check_branch
      %30 = sbr.rel (0) target = $region25
    $region24: #{clip_layer.1} parent=1 // pred_region
      _
    $region25: #{clip_layer.1} parent=1 // pred_fallthru
      _
    // Predicated region
    $region26: #{clip_layer.1} parent=1 // pred_check
      _
    $region27: #{clip_layer.1} parent=1 // pred_check_branch
      %32 = sbr.rel (0) target = $region29
    $region28: #{clip_layer.1} parent=1 // pred_region
      _
    $region29: #{clip_layer.1} parent=1 // pred_fallthru
      _
    // Predicated region
    $region30: #{clip_layer.1} parent=1 // pred_check
      _
    $region31: #{clip_layer.1} parent=1 // pred_check_branch
      %34 = sbr.rel (0) target = $region33
    $region32: #{clip_layer.1} parent=1 // pred_region
      _
    $region33: #{clip_layer.1} parent=1 // pred_fallthru
      _
    // Predicated region
    $region34: #{clip_layer.1} parent=1 // pred_check
      _
    $region35: #{clip_layer.1} parent=1 // pred_check_branch
      %36 = sbr.rel (0) target = $region37
    $region36: #{clip_layer.1} parent=1 // pred_region
      _
    $region37: #{clip_layer.1} parent=1 // pred_fallthru
      _
    // Predicated region
    $region38: #{clip_layer.1} parent=1 // pred_check
      _
    $region39: #{clip_layer.1} parent=1 // pred_check_branch
      %38 = sbr.rel (0) target = $region41
    $region40: #{clip_layer.1} parent=1 // pred_region
      _
    $region41: #{clip_layer.1} parent=1 // pred_fallthru
      _
    // Predicated region
    $region42: #{clip_layer.1} parent=1 // pred_check
      _
    $region43: #{clip_layer.1} parent=1 // pred_check_branch
      %40 = sbr.rel (0) target = $region45
    $region44: #{clip_layer.1} parent=1 // pred_region
      _
    $region45: #{clip_layer.1} parent=1 // pred_fallthru
      _
    // Predicated region
    $region46: #{clip_layer.1} parent=1 // pred_check
      _
    $region47: #{clip_layer.1} parent=1 // pred_check_branch
      %42 = sbr.rel (0) target = $region49
    $region48: #{clip_layer.1} parent=1 // pred_region
      _
    $region49: #{clip_layer.1} parent=1 // pred_fallthru
      _
    // Predicated region
    $region50: #{clip_layer.1} parent=1 // pred_check
      _
    $region51: #{clip_layer.1} parent=1 // pred_check_branch
      %44 = sbr.rel (0) target = $region53
    $region52: #{clip_layer.1} parent=1 // pred_region
      _
    $region53: #{clip_layer.1} parent=1 // pred_fallthru
      _
    %v45 = vld [vmem:[%s0] sm:$0xff]
    %v46 = vld [vmem:[%s0 + $0x8] sm:$0xff]
    %v47 = vld [vmem:[%s1] sm:$0x1]
    %v48 = vld [vmem:[%s2] sm:$0x1]
    %vm49 = vcmask 261120
    %v50 = vsel %vm49, %v45, 0.0
    %51 = vadd.xlane.f32.xlu0 %v50
    %v52 = vpop.xlane.xlu0 %51
    %v53 = vsel %vm49, %v46, 0.0
    %54 = vadd.xlane.f32.xlu0 %v53
    %v55 = vpop.xlane.xlu0 %54
    %v56 = vrcp.pop 32.0
    %v57 = vmul.f32 32.0, %v56
    %v58 = vsub.f32 1.0, %v57
    %v59 = vmul.f32 %v56, %v58
    %v60 = vadd.f32 %v56, %v59
    %vm61 = vweird.f32 %v56
    %v62 = vsel %vm61, %v56, %v60
    %v63 = vmul.f32 %v52, %v62
    %v64 = vmul.f32 %v55, %v62
    %v65 = vsub.f32 %v45, %v63
    %v66 = vsub.f32 %v46, %v64
    %v67 = vmul.f32 %v65, %v65
    %v68 = vmul.f32 %v66, %v66
    %v69 = vsel %vm49, %v67, 0.0
    %70 = vadd.xlane.f32.xlu0 %v69
    %v71 = vpop.xlane.xlu0 %70
    %v72 = vsel %vm49, %v68, 0.0
    %73 = vadd.xlane.f32.xlu0 %v72
    %v74 = vpop.xlane.xlu0 %73
    %v75 = vmul.f32 %v71, %v62
    %v76 = vmul.f32 %v74, %v62
    %v77 = vadd.f32 %v75, 1e-05
    %v78 = vadd.f32 %v76, 1e-05
    %v79 = vrsqrt.pop %v77
    %v80 = vmul.f32 %v79, %v77
    %v81 = vmul.f32 %v80, %v79
    %v82 = vmul.f32 0.5, %v81
    %v83 = vsub.f32 1.5, %v82
    %v84 = vmul.f32 %v79, %v83
    %vm85 = vweird.f32 %v77
    %vm86 = vweird.f32 %v79
    %vm87 = vmor %vm85, %vm86
    %v88 = vsel %vm87, %v79, %v84
    %v89 = vrsqrt.pop %v78
    %v90 = vmul.f32 %v89, %v78
    %v91 = vmul.f32 %v90, %v89
    %v92 = vmul.f32 0.5, %v91
    %v93 = vsub.f32 1.5, %v92
    %v94 = vmul.f32 %v89, %v93
    %vm95 = vweird.f32 %v78
    %vm96 = vweird.f32 %v89
    %vm97 = vmor %vm95, %vm96
    %v98 = vsel %vm97, %v89, %v94
    %v99 = vmul.f32 %v65, %v88
    %v100 = vmul.f32 %v66, %v98
    %v102 = vperm.slane %v47, 0
    %v104 = vmul.f32 %v99, %v102
    %v105 = vmul.f32 %v100, %v102
    %v107 = vperm.slane %v48, 0
    %v109 = vadd.f32 %v104, %v107
    %v110 = vadd.f32 %v105, %v107
    %v111 = vld [vmem:[%s3] sm:$0xff]
    %v112 = vld [vmem:[%s3 + $0x8] sm:$0xff]
    %v113 = vld [vmem:[%s3 + $0x10] sm:$0xff]
    %v114 = vld [vmem:[%s3 + $0x18] sm:$0xff]
    %v115 = vld [vmem:[%s4] sm:$0x1]
    %v117 = vperm.slane %v115, 0
    %v120 = vsel %vm49, %v109, 0
    %v123 = vsel %vm49, %v110, 0
    %125 = vmatpush.msra.mxu0 0.0
    %126 = vmatpush.msra.mxu0 0.0
    %127 = vmatpush.msra.mxu0 0.0
    %128 = vmatpush.msra.mxu0 0.0
    %129 = vmatpush.msra.mxu0 0.0
    %130 = vmatpush.msra.mxu0 0.0
    %131 = vmatpush.msra.mxu0 0.0
    %132 = vmatpush.msra.mxu0 0.0
    %133 = vmatpush.msra.mxu0 0.0
    %134 = vmatpush.msra.mxu0 0.0
    %135 = vmatpush.msra.mxu0 0.0
    %136 = vmatpush.msra.mxu0 0.0
    %137 = vmatpush.msra.mxu0 %v114
    %138 = vmatpush.msra.mxu0 %v113
    %139 = vmatpush.msra.mxu0 %v112
    %140 = vmatpush.msra.mxu0 %v111
    %141 = vmatmul.f32.gmra.mxu0 %v120
    %v142 = vpop.f32.mrf.mxu0
    %v143 = vadd.f32 %v117, %v142
    %144 = vmatmul.f32.gmra.mxu0 %v123
    %v145 = vpop.f32.mrf.mxu0
    %v146 = vadd.f32 %v117, %v145
    %147 = vdwg.mxu0
    %v148 = vmul.f32 %v143, 0.35355338
    %v149 = vmul.f32 %v146, 0.35355338
    %v150 = vlaneseq
    %v151 = vshrl.u32 %v150, 7
    %v152 = vadd.s32 %v151, 8
    %v153 = vlaneseq
    %v154 = vand.u32 %v153, 127
    %vm155 = vcmp.le.s32.totalorder %v154, %v151
    %vm156 = vcmp.le.s32.totalorder %v154, %v152
    %v157 = vshra.s32 %v151, 3
    %v158 = vshra.s32 %v152, 3
    %v159 = vshra.s32 %v154, 3
    %vm160 = vcmp.eq.s32.totalorder %v157, %v159
    %vm161 = vcmp.eq.s32.totalorder %v158, %v159
    %vm162 = vmand %vm155, %vm160
    %vm163 = vmand %vm156, %vm161
    %166 = vrot.lane.b32.xlu0 %v143, 96
    %v167 = vpop.permute.xlu0 %166
    %168 = vrot.lane.b32.xlu0 %v146, 96
    %v169 = vpop.permute.xlu0 %168
    %vm170 = vcmask 64512
    %v172 = vsel %vm170, %v148, 0
    %v175 = vsel %vm170, %v149, 0
    %v177 = vsel %vm170, %v167, 0
    %v179 = vsel %vm170, %v169, 0
    %181 = vmatpush.xpose.msra.mxu0 0.0
    %182 = vmatpush.xpose.msra.mxu0 0.0
    %183 = vmatpush.xpose.msra.mxu0 0.0
    %184 = vmatpush.xpose.msra.mxu0 0.0
    %185 = vmatpush.xpose.msra.mxu0 0.0
    %186 = vmatpush.xpose.msra.mxu0 0.0
    %187 = vmatpush.xpose.msra.mxu0 0.0
    %188 = vmatpush.xpose.msra.mxu0 0.0
    %189 = vmatpush.xpose.msra.mxu0 0.0
    %190 = vmatpush.xpose.msra.mxu0 0.0
    %191 = vmatpush.xpose.msra.mxu0 0.0
    %192 = vmatpush.xpose.msra.mxu0 0.0
    %193 = vmatpush.xpose.msra.mxu0 0.0
    %194 = vmatpush.xpose.msra.mxu0 0.0
    %195 = vmatpush.xpose.msra.mxu0 %v179
    %196 = vmatpush.xpose.msra.mxu0 %v177
    %197 = vmatmul.f32.gmra.mxu0 %v172
    %v198 = vpop.f32.mrf.mxu0
    %v199 = vadd.f32 0.0, %v198
    %200 = vmatmul.f32.gmra.mxu0 %v175
    %v201 = vpop.f32.mrf.mxu0
    %v202 = vadd.f32 0.0, %v201
    %203 = vdwg.mxu0
    %v204 = vsel %vm162, %v199, -1e+30
    %v205 = vsel %vm163, %v202, -1e+30
    %vm206 = vcmask 130048
    %v207 = vsel %vm206, %v204, -inf
    %208 = vmax.xlane.f32.xlu0 %v207
    %v209 = vpop.xlane.xlu0 %208
    %v210 = vsel %vm206, %v205, -inf
    %211 = vmax.xlane.f32.xlu0 %v210
    %v212 = vpop.xlane.xlu0 %211
    %v213 = vsub.f32 %v204, %v209
    %v214 = vsub.f32 %v205, %v212
    %v215 = vmul.f32 %v213, 1.442695
    %v216 = vpow.pop %v215
    %v217 = vmul.f32 %v214, 1.442695
    %v218 = vpow.pop %v217
    %v219 = vsel %vm206, %v216, 0.0
    %220 = vadd.xlane.f32.xlu0 %v219
    %v221 = vpop.xlane.xlu0 %220
    %v222 = vsel %vm206, %v218, 0.0
    %223 = vadd.xlane.f32.xlu0 %v222
    %v224 = vpop.xlane.xlu0 %223
    %v225 = vrcp.pop %v221
    %v226 = vrcp.pop %v224
    %v227 = vmul.f32 %v216, %v225
    %v228 = vmul.f32 %v218, %v226
    %229 = vrot.lane.b32.xlu0 %v143, 64
    %v230 = vpop.permute.xlu0 %229
    %231 = vrot.lane.b32.xlu0 %v146, 64
    %v232 = vpop.permute.xlu0 %231
    %v236 = vsel %vm206, %v227, 0
    %v239 = vsel %vm206, %v228, 0
    %241 = vmatpush.msra.mxu0 0.0
    %242 = vmatpush.msra.mxu0 0.0
    %243 = vmatpush.msra.mxu0 0.0
    %244 = vmatpush.msra.mxu0 0.0
    %245 = vmatpush.msra.mxu0 0.0
    %246 = vmatpush.msra.mxu0 0.0
    %247 = vmatpush.msra.mxu0 0.0
    %248 = vmatpush.msra.mxu0 0.0
    %249 = vmatpush.msra.mxu0 0.0
    %250 = vmatpush.msra.mxu0 0.0
    %251 = vmatpush.msra.mxu0 0.0
    %252 = vmatpush.msra.mxu0 0.0
    %253 = vmatpush.msra.mxu0 0.0
    %254 = vmatpush.msra.mxu0 0.0
    %255 = vmatpush.msra.mxu0 %v232
    %256 = vmatpush.msra.mxu0 %v230
    %257 = vmatmul.f32.gmra.mxu0 %v236
    %v258 = vpop.f32.mrf.mxu0
    %v259 = vadd.f32 0.0, %v258
    %260 = vmatmul.f32.gmra.mxu0 %v239
    %v261 = vpop.f32.mrf.mxu0
    %v262 = vadd.f32 0.0, %v261
    %263 = vdwg.mxu0
    %264 = vst.msk [vmem:[#allocation2] sm:$0xff] %vm170, %v259
    %265 = vst.msk [vmem:[#allocation2 + $0x8] sm:$0xff] %vm170, %v262
    %266 = vrot.lane.b32.xlu0 %v148, 120
    %v267 = vpop.permute.xlu0 %266
    %268 = vrot.lane.b32.xlu0 %v149, 120
    %v269 = vpop.permute.xlu0 %268
    %270 = vrot.lane.b32.xlu0 %v143, 88
    %v271 = vpop.permute.xlu0 %270
    %272 = vrot.lane.b32.xlu0 %v146, 88
    %v273 = vpop.permute.xlu0 %272
    %v274 = vsel %vm170, %v267, 0
    %v276 = vsel %vm170, %v269, 0
    %v278 = vsel %vm170, %v271, 0
    %v280 = vsel %vm170, %v273, 0
    %282 = vmatpush.xpose.msra.mxu0 0.0
    %283 = vmatpush.xpose.msra.mxu0 0.0
    %284 = vmatpush.xpose.msra.mxu0 0.0
    %285 = vmatpush.xpose.msra.mxu0 0.0
    %286 = vmatpush.xpose.msra.mxu0 0.0
    %287 = vmatpush.xpose.msra.mxu0 0.0
    %288 = vmatpush.xpose.msra.mxu0 0.0
    %289 = vmatpush.xpose.msra.mxu0 0.0
    %290 = vmatpush.xpose.msra.mxu0 0.0
    %291 = vmatpush.xpose.msra.mxu0 0.0
    %292 = vmatpush.xpose.msra.mxu0 0.0
    %293 = vmatpush.xpose.msra.mxu0 0.0
    %294 = vmatpush.xpose.msra.mxu0 0.0
    %295 = vmatpush.xpose.msra.mxu0 0.0
    %296 = vmatpush.xpose.msra.mxu0 %v280
    %297 = vmatpush.xpose.msra.mxu0 %v278
    %298 = vmatmul.f32.gmra.mxu0 %v274
    %v299 = vpop.f32.mrf.mxu0
    %v300 = vadd.f32 0.0, %v299
    %301 = vmatmul.f32.gmra.mxu0 %v276
    %v302 = vpop.f32.mrf.mxu0
    %v303 = vadd.f32 0.0, %v302
    %304 = vdwg.mxu0
    %v305 = vsel %vm162, %v300, -1e+30
    %v306 = vsel %vm163, %v303, -1e+30
    %v307 = vsel %vm206, %v305, -inf
    %308 = vmax.xlane.f32.xlu0 %v307
    %v309 = vpop.xlane.xlu0 %308
    %v310 = vsel %vm206, %v306, -inf
    %311 = vmax.xlane.f32.xlu0 %v310
    %v312 = vpop.xlane.xlu0 %311
    %v313 = vsub.f32 %v305, %v309
    %v314 = vsub.f32 %v306, %v312
    %v315 = vmul.f32 %v313, 1.442695
    %v316 = vpow.pop %v315
    %v317 = vmul.f32 %v314, 1.442695
    %v318 = vpow.pop %v317
    %v319 = vsel %vm206, %v316, 0.0
    %320 = vadd.xlane.f32.xlu0 %v319
    %v321 = vpop.xlane.xlu0 %320
    %v322 = vsel %vm206, %v318, 0.0
    %323 = vadd.xlane.f32.xlu0 %v322
    %v324 = vpop.xlane.xlu0 %323
    %v325 = vrcp.pop %v321
    %v326 = vrcp.pop %v324
    %v327 = vmul.f32 %v316, %v325
    %v328 = vmul.f32 %v318, %v326
    %329 = vrot.lane.b32.xlu0 %v143, 56
    %v330 = vpop.permute.xlu0 %329
    %331 = vrot.lane.b32.xlu0 %v146, 56
    %v332 = vpop.permute.xlu0 %331
    %v336 = vsel %vm206, %v327, 0
    %v339 = vsel %vm206, %v328, 0
    %341 = vmatpush.msra.mxu0 0.0
    %342 = vmatpush.msra.mxu0 0.0
    %343 = vmatpush.msra.mxu0 0.0
    %344 = vmatpush.msra.mxu0 0.0
    %345 = vmatpush.msra.mxu0 0.0
    %346 = vmatpush.msra.mxu0 0.0
    %347 = vmatpush.msra.mxu0 0.0
    %348 = vmatpush.msra.mxu0 0.0
    %349 = vmatpush.msra.mxu0 0.0
    %350 = vmatpush.msra.mxu0 0.0
    %351 = vmatpush.msra.mxu0 0.0
    %352 = vmatpush.msra.mxu0 0.0
    %353 = vmatpush.msra.mxu0 0.0
    %354 = vmatpush.msra.mxu0 0.0
    %355 = vmatpush.msra.mxu0 %v332
    %356 = vmatpush.msra.mxu0 %v330
    %357 = vmatmul.f32.gmra.mxu0 %v336
    %v358 = vpop.f32.mrf.mxu0
    %v359 = vadd.f32 0.0, %v358
    %360 = vmatmul.f32.gmra.mxu0 %v339
    %v361 = vpop.f32.mrf.mxu0
    %v362 = vadd.f32 0.0, %v361
    %363 = vdwg.mxu0
    %366 = vrot.lane.b32.xlu0 %v359, 8
    %v367 = vpop.permute.xlu0 %366
    %368 = vrot.lane.b32.xlu0 %v362, 8
    %v369 = vpop.permute.xlu0 %368
    %vm372 = vcmask 130112
    %373 = vst.msk [vmem:[#allocation2] sm:$0xff] %vm372, %v367
    %374 = vst.msk [vmem:[#allocation2 + $0x8] sm:$0xff] %vm372, %v369
    %375 = vrot.lane.b32.xlu0 %v148, 112
    %v376 = vpop.permute.xlu0 %375
    %377 = vrot.lane.b32.xlu0 %v149, 112
    %v378 = vpop.permute.xlu0 %377
    %379 = vrot.lane.b32.xlu0 %v143, 80
    %v380 = vpop.permute.xlu0 %379
    %381 = vrot.lane.b32.xlu0 %v146, 80
    %v382 = vpop.permute.xlu0 %381
    %v383 = vsel %vm170, %v376, 0
    %v385 = vsel %vm170, %v378, 0
    %v387 = vsel %vm170, %v380, 0
    %v389 = vsel %vm170, %v382, 0
    %391 = vmatpush.xpose.msra.mxu0 0.0
    %392 = vmatpush.xpose.msra.mxu0 0.0
    %393 = vmatpush.xpose.msra.mxu0 0.0
    %394 = vmatpush.xpose.msra.mxu0 0.0
    %395 = vmatpush.xpose.msra.mxu0 0.0
    %396 = vmatpush.xpose.msra.mxu0 0.0
    %397 = vmatpush.xpose.msra.mxu0 0.0
    %398 = vmatpush.xpose.msra.mxu0 0.0
    %399 = vmatpush.xpose.msra.mxu0 0.0
    %400 = vmatpush.xpose.msra.mxu0 0.0
    %401 = vmatpush.xpose.msra.mxu0 0.0
    %402 = vmatpush.xpose.msra.mxu0 0.0
    %403 = vmatpush.xpose.msra.mxu0 0.0
    %404 = vmatpush.xpose.msra.mxu0 0.0
    %405 = vmatpush.xpose.msra.mxu0 %v389
    %406 = vmatpush.xpose.msra.mxu0 %v387
    %407 = vmatmul.f32.gmra.mxu0 %v383
    %v408 = vpop.f32.mrf.mxu0
    %v409 = vadd.f32 0.0, %v408
    %410 = vmatmul.f32.gmra.mxu0 %v385
    %v411 = vpop.f32.mrf.mxu0
    %v412 = vadd.f32 0.0, %v411
    %413 = vdwg.mxu0
    %v414 = vsel %vm162, %v409, -1e+30
    %v415 = vsel %vm163, %v412, -1e+30
    %v416 = vsel %vm206, %v414, -inf
    %417 = vmax.xlane.f32.xlu0 %v416
    %v418 = vpop.xlane.xlu0 %417
    %v419 = vsel %vm206, %v415, -inf
    %420 = vmax.xlane.f32.xlu0 %v419
    %v421 = vpop.xlane.xlu0 %420
    %v422 = vsub.f32 %v414, %v418
    %v423 = vsub.f32 %v415, %v421
    %v424 = vmul.f32 %v422, 1.442695
    %v425 = vpow.pop %v424
    %v426 = vmul.f32 %v423, 1.442695
    %v427 = vpow.pop %v426
    %v428 = vsel %vm206, %v425, 0.0
    %429 = vadd.xlane.f32.xlu0 %v428
    %v430 = vpop.xlane.xlu0 %429
    %v431 = vsel %vm206, %v427, 0.0
    %432 = vadd.xlane.f32.xlu0 %v431
    %v433 = vpop.xlane.xlu0 %432
    %v434 = vrcp.pop %v430
    %v435 = vrcp.pop %v433
    %v436 = vmul.f32 %v425, %v434
    %v437 = vmul.f32 %v427, %v435
    %438 = vrot.lane.b32.xlu0 %v143, 48
    %v439 = vpop.permute.xlu0 %438
    %440 = vrot.lane.b32.xlu0 %v146, 48
    %v441 = vpop.permute.xlu0 %440
    %v445 = vsel %vm206, %v436, 0
    %v448 = vsel %vm206, %v437, 0
    %450 = vmatpush.msra.mxu0 0.0
    %451 = vmatpush.msra.mxu0 0.0
    %452 = vmatpush.msra.mxu0 0.0
    %453 = vmatpush.msra.mxu0 0.0
    %454 = vmatpush.msra.mxu0 0.0
    %455 = vmatpush.msra.mxu0 0.0
    %456 = vmatpush.msra.mxu0 0.0
    %457 = vmatpush.msra.mxu0 0.0
    %458 = vmatpush.msra.mxu0 0.0
    %459 = vmatpush.msra.mxu0 0.0
    %460 = vmatpush.msra.mxu0 0.0
    %461 = vmatpush.msra.mxu0 0.0
    %462 = vmatpush.msra.mxu0 0.0
    %463 = vmatpush.msra.mxu0 0.0
    %464 = vmatpush.msra.mxu0 %v441
    %465 = vmatpush.msra.mxu0 %v439
    %466 = vmatmul.f32.gmra.mxu0 %v445
    %v467 = vpop.f32.mrf.mxu0
    %v468 = vadd.f32 0.0, %v467
    %469 = vmatmul.f32.gmra.mxu0 %v448
    %v470 = vpop.f32.mrf.mxu0
    %v471 = vadd.f32 0.0, %v470
    %472 = vdwg.mxu0
    %475 = vrot.lane.b32.xlu0 %v468, 16
    %v476 = vpop.permute.xlu0 %475
    %477 = vrot.lane.b32.xlu0 %v471, 16
    %v478 = vpop.permute.xlu0 %477
    %vm481 = vcmask 195712
    %482 = vst.msk [vmem:[#allocation2] sm:$0xff] %vm481, %v476
    %483 = vst.msk [vmem:[#allocation2 + $0x8] sm:$0xff] %vm481, %v478
    %484 = vrot.lane.b32.xlu0 %v148, 104
    %v485 = vpop.permute.xlu0 %484
    %486 = vrot.lane.b32.xlu0 %v149, 104
    %v487 = vpop.permute.xlu0 %486
    %488 = vrot.lane.b32.xlu0 %v143, 72
    %v489 = vpop.permute.xlu0 %488
    %490 = vrot.lane.b32.xlu0 %v146, 72
    %v491 = vpop.permute.xlu0 %490
    %v492 = vsel %vm170, %v485, 0
    %v494 = vsel %vm170, %v487, 0
    %v496 = vsel %vm170, %v489, 0
    %v498 = vsel %vm170, %v491, 0
    %500 = vmatpush.xpose.msra.mxu0 0.0
    %501 = vmatpush.xpose.msra.mxu0 0.0
    %502 = vmatpush.xpose.msra.mxu0 0.0
    %503 = vmatpush.xpose.msra.mxu0 0.0
    %504 = vmatpush.xpose.msra.mxu0 0.0
    %505 = vmatpush.xpose.msra.mxu0 0.0
    %506 = vmatpush.xpose.msra.mxu0 0.0
    %507 = vmatpush.xpose.msra.mxu0 0.0
    %508 = vmatpush.xpose.msra.mxu0 0.0
    %509 = vmatpush.xpose.msra.mxu0 0.0
    %510 = vmatpush.xpose.msra.mxu0 0.0
    %511 = vmatpush.xpose.msra.mxu0 0.0
    %512 = vmatpush.xpose.msra.mxu0 0.0
    %513 = vmatpush.xpose.msra.mxu0 0.0
    %514 = vmatpush.xpose.msra.mxu0 %v498
    %515 = vmatpush.xpose.msra.mxu0 %v496
    %516 = vmatmul.f32.gmra.mxu0 %v492
    %v517 = vpop.f32.mrf.mxu0
    %v518 = vadd.f32 0.0, %v517
    %519 = vmatmul.f32.gmra.mxu0 %v494
    %v520 = vpop.f32.mrf.mxu0
    %v521 = vadd.f32 0.0, %v520
    %522 = vdwg.mxu0
    %v523 = vsel %vm162, %v518, -1e+30
    %v524 = vsel %vm163, %v521, -1e+30
    %v525 = vsel %vm206, %v523, -inf
    %526 = vmax.xlane.f32.xlu0 %v525
    %v527 = vpop.xlane.xlu0 %526
    %v528 = vsel %vm206, %v524, -inf
    %529 = vmax.xlane.f32.xlu0 %v528
    %v530 = vpop.xlane.xlu0 %529
    %v531 = vsub.f32 %v523, %v527
    %v532 = vsub.f32 %v524, %v530
    %v533 = vmul.f32 %v531, 1.442695
    %v534 = vpow.pop %v533
    %v535 = vmul.f32 %v532, 1.442695
    %v536 = vpow.pop %v535
    %v537 = vsel %vm206, %v534, 0.0
    %538 = vadd.xlane.f32.xlu0 %v537
    %v539 = vpop.xlane.xlu0 %538
    %v540 = vsel %vm206, %v536, 0.0
    %541 = vadd.xlane.f32.xlu0 %v540
    %v542 = vpop.xlane.xlu0 %541
    %v543 = vrcp.pop %v539
    %v544 = vrcp.pop %v542
    %v545 = vmul.f32 %v534, %v543
    %v546 = vmul.f32 %v536, %v544
    %547 = vrot.lane.b32.xlu0 %v143, 40
    %v548 = vpop.permute.xlu0 %547
    %549 = vrot.lane.b32.xlu0 %v146, 40
    %v550 = vpop.permute.xlu0 %549
    %v554 = vsel %vm206, %v545, 0
    %v557 = vsel %vm206, %v546, 0
    %559 = vmatpush.msra.mxu0 0.0
    %560 = vmatpush.msra.mxu0 0.0
    %561 = vmatpush.msra.mxu0 0.0
    %562 = vmatpush.msra.mxu0 0.0
    %563 = vmatpush.msra.mxu0 0.0
    %564 = vmatpush.msra.mxu0 0.0
    %565 = vmatpush.msra.mxu0 0.0
    %566 = vmatpush.msra.mxu0 0.0
    %567 = vmatpush.msra.mxu0 0.0
    %568 = vmatpush.msra.mxu0 0.0
    %569 = vmatpush.msra.mxu0 0.0
    %570 = vmatpush.msra.mxu0 0.0
    %571 = vmatpush.msra.mxu0 0.0
    %572 = vmatpush.msra.mxu0 0.0
    %573 = vmatpush.msra.mxu0 %v550
    %574 = vmatpush.msra.mxu0 %v548
    %575 = vmatmul.f32.gmra.mxu0 %v554
    %v576 = vpop.f32.mrf.mxu0
    %v577 = vadd.f32 0.0, %v576
    %578 = vmatmul.f32.gmra.mxu0 %v557
    %v579 = vpop.f32.mrf.mxu0
    %v580 = vadd.f32 0.0, %v579
    %581 = vdwg.mxu0
    %584 = vrot.lane.b32.xlu0 %v577, 24
    %v585 = vpop.permute.xlu0 %584
    %586 = vrot.lane.b32.xlu0 %v580, 24
    %v587 = vpop.permute.xlu0 %586
    %vm590 = vcmask 261312
    %591 = vst.msk [vmem:[#allocation2] sm:$0xff] %vm590, %v585
    %592 = vst.msk [vmem:[#allocation2 + $0x8] sm:$0xff] %vm590, %v587
    %v593 = vld [vmem:[#allocation2] sm:$0xff]
    %v594 = vld [vmem:[#allocation2 + $0x8] sm:$0xff]
    %v595 = vld [vmem:[%s5] sm:$0xff]
    %v596 = vld [vmem:[%s5 + $0x8] sm:$0xff]
    %v597 = vld [vmem:[%s5 + $0x10] sm:$0xff]
    %v598 = vld [vmem:[%s5 + $0x18] sm:$0xff]
    %v599 = vld [vmem:[%s6] sm:$0x1]
    %v601 = vperm.slane %v599, 0
    %v604 = vsel %vm49, %v593, 0
    %v607 = vsel %vm49, %v594, 0
    %609 = vmatpush.msra.mxu0 0.0
    %610 = vmatpush.msra.mxu0 0.0
    %611 = vmatpush.msra.mxu0 0.0
    %612 = vmatpush.msra.mxu0 0.0
    %613 = vmatpush.msra.mxu0 0.0
    %614 = vmatpush.msra.mxu0 0.0
    %615 = vmatpush.msra.mxu0 0.0
    %616 = vmatpush.msra.mxu0 0.0
    %617 = vmatpush.msra.mxu0 0.0
    %618 = vmatpush.msra.mxu0 0.0
    %619 = vmatpush.msra.mxu0 0.0
    %620 = vmatpush.msra.mxu0 0.0
    %621 = vmatpush.msra.mxu0 %v598
    %622 = vmatpush.msra.mxu0 %v597
    %623 = vmatpush.msra.mxu0 %v596
    %624 = vmatpush.msra.mxu0 %v595
    %625 = vmatmul.f32.gmra.mxu0 %v604
    %v626 = vpop.f32.mrf.mxu0
    %v627 = vadd.f32 %v601, %v626
    %628 = vmatmul.f32.gmra.mxu0 %v607
    %v629 = vpop.f32.mrf.mxu0
    %v630 = vadd.f32 %v601, %v629
    %631 = vdwg.mxu0
    %v632 = vld [vmem:[%s7] sm:$0x1]
    %v633 = vld [vmem:[%s8] sm:$0x1]
    %v634 = vsel %vm49, %v627, 0.0
    %635 = vadd.xlane.f32.xlu0 %v634
    %v636 = vpop.xlane.xlu0 %635
    %v637 = vsel %vm49, %v630, 0.0
    %638 = vadd.xlane.f32.xlu0 %v637
    %v639 = vpop.xlane.xlu0 %638
    %v640 = vmul.f32 %v636, %v62
    %v641 = vmul.f32 %v639, %v62
    %v642 = vsub.f32 %v627, %v640
    %v643 = vsub.f32 %v630, %v641
    %v644 = vmul.f32 %v642, %v642
    %v645 = vmul.f32 %v643, %v643
    %v646 = vsel %vm49, %v644, 0.0
    %647 = vadd.xlane.f32.xlu0 %v646
    %v648 = vpop.xlane.xlu0 %647
    %v649 = vsel %vm49, %v645, 0.0
    %650 = vadd.xlane.f32.xlu0 %v649
    %v651 = vpop.xlane.xlu0 %650
    %v652 = vmul.f32 %v648, %v62
    %v653 = vmul.f32 %v651, %v62
    %v654 = vadd.f32 %v652, 1e-05
    %v655 = vadd.f32 %v653, 1e-05
    %v656 = vrsqrt.pop %v654
    %v657 = vmul.f32 %v656, %v654
    %v658 = vmul.f32 %v657, %v656
    %v659 = vmul.f32 0.5, %v658
    %v660 = vsub.f32 1.5, %v659
    %v661 = vmul.f32 %v656, %v660
    %vm662 = vweird.f32 %v654
    %vm663 = vweird.f32 %v656
    %vm664 = vmor %vm662, %vm663
    %v665 = vsel %vm664, %v656, %v661
    %v666 = vrsqrt.pop %v655
    %v667 = vmul.f32 %v666, %v655
    %v668 = vmul.f32 %v667, %v666
    %v669 = vmul.f32 0.5, %v668
    %v670 = vsub.f32 1.5, %v669
    %v671 = vmul.f32 %v666, %v670
    %vm672 = vweird.f32 %v655
    %vm673 = vweird.f32 %v666
    %vm674 = vmor %vm672, %vm673
    %v675 = vsel %vm674, %v666, %v671
    %v676 = vmul.f32 %v642, %v665
    %v677 = vmul.f32 %v643, %v675
    %v679 = vperm.slane %v632, 0
    %v681 = vmul.f32 %v676, %v679
    %v682 = vmul.f32 %v677, %v679
    %v684 = vperm.slane %v633, 0
    %v686 = vadd.f32 %v681, %v684
    %v687 = vadd.f32 %v682, %v684
    %v688 = vadd.f32 %v686, %v45
    %v689 = vadd.f32 %v687, %v46
    %v690 = vld [vmem:[%s9] sm:$0xff]
    %v691 = vld [vmem:[%s9 + $0x8] sm:$0xff]
    %v692 = vld [vmem:[%s9 + $0x10] sm:$0xff]
    %v693 = vld [vmem:[%s9 + $0x18] sm:$0xff]
    %v694 = vld [vmem:[%s10] sm:$0x1]
    %v696 = vperm.slane %v694, 0
    %v699 = vsel %vm49, %v688, 0
    %v702 = vsel %vm49, %v689, 0
    %704 = vmatpush.msra.mxu0 0.0
    %705 = vmatpush.msra.mxu0 0.0
    %706 = vmatpush.msra.mxu0 0.0
    %707 = vmatpush.msra.mxu0 0.0
    %708 = vmatpush.msra.mxu0 0.0
    %709 = vmatpush.msra.mxu0 0.0
    %710 = vmatpush.msra.mxu0 0.0
    %711 = vmatpush.msra.mxu0 0.0
    %712 = vmatpush.msra.mxu0 0.0
    %713 = vmatpush.msra.mxu0 0.0
    %714 = vmatpush.msra.mxu0 0.0
    %715 = vmatpush.msra.mxu0 0.0
    %716 = vmatpush.msra.mxu0 %v693
    %717 = vmatpush.msra.mxu0 %v692
    %718 = vmatpush.msra.mxu0 %v691
    %719 = vmatpush.msra.mxu0 %v690
    %720 = vmatmul.f32.gmra.mxu0 %v699
    %v721 = vpop.f32.mrf.mxu0
    %v722 = vadd.f32 %v696, %v721
    %723 = vmatmul.f32.gmra.mxu0 %v702
    %v724 = vpop.f32.mrf.mxu0
    %v725 = vadd.f32 %v696, %v724
    %726 = vdwg.mxu0
    %v727 = vmul.f32 %v722, 1.782
    %v728 = vmul.f32 %v725, 1.782
    %v729 = vxor.u32 %v727, 2147483648
    %v730 = vxor.u32 %v728, 2147483648
    %v731 = vmul.f32 %v729, 1.442695
    %v732 = vpow.pop %v731
    %v733 = vmul.f32 %v730, 1.442695
    %v734 = vpow.pop %v733
    %v735 = vadd.f32 %v732, 1.0
    %v736 = vadd.f32 %v734, 1.0
    %v737 = vrcp.pop %v735
    %v738 = vmul.f32 %v735, %v737
    %v739 = vsub.f32 1.0, %v738
    %v740 = vmul.f32 %v737, %v739
    %v741 = vadd.f32 %v737, %v740
    %vm742 = vweird.f32 %v735
    %vm743 = vweird.f32 %v737
    %vm744 = vmor %vm742, %vm743
    %v745 = vsel %vm744, %v737, %v741
    %v746 = vand.u32 2147483647, %v735
    %vm747 = vcmp.eq.f32.partialorder %v746, 8.507059e+37
    %v748 = vand.u32 %v735, 2147483648
    %v749 = vor.u32 1.1754944e-38, %v748
    %v750 = vsel %vm747, %v749, %v745
    %v751 = vmul.f32 1.0, %v750
    %v752 = vrcp.pop %v736
    %v753 = vmul.f32 %v736, %v752
    %v754 = vsub.f32 1.0, %v753
    %v755 = vmul.f32 %v752, %v754
    %v756 = vadd.f32 %v752, %v755
    %vm757 = vweird.f32 %v736
    %vm758 = vweird.f32 %v752
    %vm759 = vmor %vm757, %vm758
    %v760 = vsel %vm759, %v752, %v756
    %v761 = vand.u32 2147483647, %v736
    %vm762 = vcmp.eq.f32.partialorder %v761, 8.507059e+37
    %v763 = vand.u32 %v736, 2147483648
    %v764 = vor.u32 1.1754944e-38, %v763
    %v765 = vsel %vm762, %v764, %v760
    %v766 = vmul.f32 1.0, %v765
    %v767 = vmul.f32 %v722, %v751
    %v768 = vmul.f32 %v725, %v766
    %v769 = vld [vmem:[%s11] sm:$0xff]
    %v770 = vld [vmem:[%s11 + $0x8] sm:$0xff]
    %v771 = vld [vmem:[%s11 + $0x10] sm:$0xff]
    %v772 = vld [vmem:[%s11 + $0x18] sm:$0xff]
    %v773 = vld [vmem:[%s11 + $0x20] sm:$0xff]
    %v774 = vld [vmem:[%s11 + $0x28] sm:$0xff]
    %v775 = vld [vmem:[%s11 + $0x30] sm:$0xff]
    %v776 = vld [vmem:[%s11 + $0x38] sm:$0xff]
    %v777 = vld [vmem:[%s11 + $0x40] sm:$0xff]
    %v778 = vld [vmem:[%s11 + $0x48] sm:$0xff]
    %v779 = vld [vmem:[%s11 + $0x50] sm:$0xff]
    %v780 = vld [vmem:[%s11 + $0x58] sm:$0xff]
    %v781 = vld [vmem:[%s11 + $0x60] sm:$0xff]
    %v782 = vld [vmem:[%s11 + $0x68] sm:$0xff]
    %v783 = vld [vmem:[%s11 + $0x70] sm:$0xff]
    %v784 = vld [vmem:[%s11 + $0x78] sm:$0xff]
    %v785 = vld [vmem:[%s12] sm:$0x1]
    %v787 = vperm.slane %v785, 0
    %789 = vmatpush.msra.mxu0 %v784
    %790 = vmatpush.msra.mxu0 %v783
    %791 = vmatpush.msra.mxu0 %v782
    %792 = vmatpush.msra.mxu0 %v781
    %793 = vmatpush.msra.mxu0 %v780
    %794 = vmatpush.msra.mxu0 %v779
    %795 = vmatpush.msra.mxu0 %v778
    %796 = vmatpush.msra.mxu0 %v777
    %797 = vmatpush.msra.mxu0 %v776
    %798 = vmatpush.msra.mxu0 %v775
    %799 = vmatpush.msra.mxu0 %v774
    %800 = vmatpush.msra.mxu0 %v773
    %801 = vmatpush.msra.mxu0 %v772
    %802 = vmatpush.msra.mxu0 %v771
    %803 = vmatpush.msra.mxu0 %v770
    %804 = vmatpush.msra.mxu0 %v769
    %805 = vmatmul.f32.gmra.mxu0 %v767
    %v806 = vpop.f32.mrf.mxu0
    %v807 = vadd.f32 %v787, %v806
    %808 = vmatmul.f32.gmra.mxu0 %v768
    %v809 = vpop.f32.mrf.mxu0
    %v810 = vadd.f32 %v787, %v809
    %811 = vdwg.mxu0
    %v812 = vadd.f32 %v807, %v688
    %v813 = vadd.f32 %v810, %v689
    %814 = vst.msk [vmem:[#allocation3] sm:$0xff] %vm49, %v812
    %815 = vst.msk [vmem:[#allocation3 + $0x8] sm:$0xff] %vm49, %v813
    // Predicated region
    $region54: #{clip_layer.1} parent=1 // pred_check
      _
    $region55: #{clip_layer.1} parent=1 // pred_check_branch
      %817 = sbr.rel (0) target = $region57
    $region56: #{clip_layer.1} parent=1 // pred_region
      %819 = vsyncadd [#allocation4], 0
      %s820 = sshll.u32 [#allocation3], 4
      %s821 = int_to_ptr.vmem [resolvable:$true] %s820
      %s822 = sshll.u32 %s13, 4
      %s823 = int_to_ptr.hbm [resolvable:$true] %s822
      %828 = dma.vmem_to_hbm [thread:$0]  %s821, 256, %s823, [#allocation4], 128, 128, 8
    $region57: #{clip_layer.1} parent=1 // pred_fallthru
      _
    // Predicated region
    $region58: #{clip_layer.1} parent=1 // pred_check
      _
    $region59: #{clip_layer.1} parent=1 // pred_check_branch
      %830 = sbr.rel (0) target = $region61
    $region60: #{clip_layer.1} parent=1 // pred_region
      %832 = dma.done [#allocation4], 256
    $region61: #{clip_layer.1} parent=1 // pred_fallthru
      _
    %833 = vsyncpa [#allocation4], 1

</llo_original>
